<compile_context>
chip_gen: v7x
topology: tpu7x:2x2x1
jax: 0.10.0
libtpu: 0.0.40
codegen_flags: <defaults>
</compile_context>

<pallas_src>
import jax
import jax.numpy as jnp
from jax import lax
from jax.experimental import pallas as pl
from jax.experimental.pallas import tpu as pltpu


def mlp_softmax_kernel(x_ref, w1_ref, b1_ref, w2_ref, b2_ref, o_ref):
    # x tile (TB, F) f32 -> bf16 on the VPU (in-kernel cast, no wrapper pass).
    xb = x_ref[...].astype(jnp.bfloat16)

    # h^T = tanh(W1 @ x^T + b1): contract F (last dim of both operands,
    # q·k^T pattern) -> (H, TB).  Batch lives on the lane axis (lane-dense).
    h_t = jnp.tanh(
        lax.dot_general(
            w1_ref[...], xb,
            dimension_numbers=(((1,), (1,)), ((), ())),
            preferred_element_type=jnp.float32,
        )
        + b1_ref[...]                       # (H, 1) broadcast along lanes
    )

    # dropout(p=0.3): identity in eval mode.
    # TODO(synk): training-mode dropout (pltpu.prng_random_bits mask) not implemented.

    # logits^T = W2 @ h^T + b2 -> (C, TB); bf16 operands, f32 accumulate.
    logits_t = (
        jnp.dot(w2_ref[...], h_t.astype(jnp.bfloat16),
                preferred_element_type=jnp.float32)
        + b2_ref[...]                       # (C, 1) broadcast along lanes
    )

    # Numerically stable softmax over the class (sublane) axis: only C=8
    # sublanes, so the cross-sublane max/sum are cheap XLU ops.  Exact
    # reciprocal (EUP) + VPU multiply; rows sum to 1 tightly.
    m = jnp.max(logits_t, axis=0, keepdims=True)
    e = jnp.exp(logits_t - m)
    denom = jnp.sum(e, axis=0, keepdims=True)
    o_ref[...] = e * pl.reciprocal(denom)


def _round_up(x, m):
    return ((x + m - 1) // m) * m


def net_forward(x, w1, b1, w2, b2, *, block_b=16384):
    """Forward pass of `Net` in eval mode.

    x:  (B, F) float32
    w1: (H, F) = fc1.weight (PyTorch (out, in) orientation), H = 64
    b1: (H,)   = fc1.bias
    w2: (C, H) = fc99.weight
    b2: (C,)   = fc99.bias
    Returns softmax probabilities of shape (B, C), float32.
    """
    B, F = x.shape
    H, F2 = w1.shape
    C, H2 = w2.shape
    assert F2 == F and H2 == H

    # Tiny one-time parameter prep: bf16 weights for the MXU, biases as
    # f32 columns (added to the f32 accumulator, broadcast along lanes).
    w1_bf = w1.astype(jnp.bfloat16)
    w2_bf = w2.astype(jnp.bfloat16)
    b1c = jnp.asarray(b1, jnp.float32).reshape(H, 1)
    b2c = jnp.asarray(b2, jnp.float32).reshape(C, 1)

    # Batch tile: a multiple of 128 (lane-dense transposed output), capped at
    # block_b, and sized so the grid has >= 2 steps whenever B >= 256 (v7x
    # megacore gets work on both TensorCores).
    block_b = max(128, _round_up(block_b, 128))
    tb = min(block_b, _round_up(pl.cdiv(B, 2), 128))
    n_blocks = pl.cdiv(B, tb)
    b_pad = n_blocks * tb  # output is allocated padded; x is read ragged.

    out_t = pl.pallas_call(
        mlp_softmax_kernel,
        out_shape=jax.ShapeDtypeStruct((C, b_pad), jnp.float32),
        grid=(n_blocks,),
        in_specs=[
            pl.BlockSpec((tb, F), lambda i: (i, 0)),   # streamed f32 batch tile
            pl.BlockSpec((H, F), lambda i: (0, 0)),    # VMEM-resident weights
            pl.BlockSpec((H, 1), lambda i: (0, 0)),
            pl.BlockSpec((C, H), lambda i: (0, 0)),
            pl.BlockSpec((C, 1), lambda i: (0, 0)),
        ],
        out_specs=pl.BlockSpec((C, tb), lambda i: (0, i)),  # lane-dense store
        compiler_params=pltpu.CompilerParams(
            # Batch tiles are independent -> shard across TCs on v7x megacore.
            dimension_semantics=("parallel",),
            # Explicit limit: covers v5e's 16 MiB scoped default now that the
            # f32 x tile is large; actual usage at tb=16384 is ~15 MiB.
            vmem_limit_bytes=32 * 1024 * 1024,
        ),
    )(x, w1_bf, b1c, w2_bf, b2c)

    # (C, b_pad) -> (B, C): tiny wrapper transpose of the small output slab.
    return out_t[:, :B].T


def _reference_bf16(x, w1, b1, w2, b2):
    """Pure-JAX reference matching the kernel's bf16-operand / f32-accumulate math."""
    h = jnp.tanh(
        jnp.dot(x.astype(jnp.bfloat16), w1.T.astype(jnp.bfloat16),
                preferred_element_type=jnp.float32) + b1
    )
    logits = jnp.dot(h.astype(jnp.bfloat16), w2.T.astype(jnp.bfloat16),
                     preferred_element_type=jnp.float32) + b2
    return jax.nn.softmax(logits, axis=1)


if __name__ == "__main__":
    # Shapes consistent with the module: n_features=32, hidden=64, n_classes=8.
    # B=300 exercises the multi-block grid (tb=256 -> 2 steps) and the ragged
    # (unpadded) last batch block.
    B, F, H, C = 300, 32, 64, 8

    key = jax.random.PRNGKey(0)
    kx, kw1, kb1, kw2, kb2 = jax.random.split(key, 5)

    x = jax.random.normal(kx, (B, F), dtype=jnp.float32)

    # Deterministic synthetic parameters in PyTorch nn.Linear orientation.
    bound1 = 1.0 / jnp.sqrt(jnp.float32(F))
    w1 = jax.random.uniform(kw1, (H, F), minval=-bound1, maxval=bound1, dtype=jnp.float32)
    b1 = jax.random.uniform(kb1, (H,), minval=-bound1, maxval=bound1, dtype=jnp.float32)
    bound2 = 1.0 / jnp.sqrt(jnp.float32(H))
    w2 = jax.random.uniform(kw2, (C, H), minval=-bound2, maxval=bound2, dtype=jnp.float32)
    b2 = jax.random.uniform(kb2, (C,), minval=-bound2, maxval=bound2, dtype=jnp.float32)

    out = net_forward(x, w1, b1, w2, b2)
    out = jax.block_until_ready(out)
    assert out.shape == (B, C)

    # Check against a reference using the same bf16-operand math.
    ref_bf16 = _reference_bf16(x, w1, b1, w2, b2)
    assert jnp.allclose(out, ref_bf16, atol=1e-2, rtol=1e-2)

    # Rows sum to 1 tightly (exact reciprocal in the softmax normalize).
    assert jnp.allclose(jnp.sum(out, axis=1), 1.0, atol=1e-3)

    # And stay close to the full-f32 PyTorch-equivalent forward.
    ref_f32 = jax.nn.softmax(jnp.tanh(x @ w1.T + b1) @ w2.T + b2, axis=1)
    assert jnp.allclose(out, ref_f32, atol=3e-2)

    print("KERNEL_OK")
</pallas_src>

<mosaic_0001>
module attributes {stable_mosaic.version = 11 : i64} {
  func.func @mlp_softmax_kernel(%arg0: i32, %arg1: memref<256x32xf32, #tpu.memory_space<vmem>>, %arg2: memref<64x32xbf16, #tpu.memory_space<vmem>>, %arg3: memref<64x1xf32, #tpu.memory_space<vmem>>, %arg4: memref<8x64xbf16, #tpu.memory_space<vmem>>, %arg5: memref<8x1xf32, #tpu.memory_space<vmem>>, %arg6: memref<8x256xf32, #tpu.memory_space<vmem>>) attributes {dimension_semantics = [#tpu.dimension_semantics<parallel>], iteration_bounds = array<i64: 2>, scalar_prefetch = 0 : i64, scratch_operands = 0 : i64, tpu.core_type = #tpu.core_type<tc>, window_params = [{transform_indices = @transform_0, window_bounds = array<i64: 256, 32>}, {pipeline_mode = #tpu.pipeline_mode<synchronous>, transform_indices = @transform_1, window_bounds = array<i64: 64, 32>}, {pipeline_mode = #tpu.pipeline_mode<synchronous>, transform_indices = @transform_2, window_bounds = array<i64: 64, 1>}, {pipeline_mode = #tpu.pipeline_mode<synchronous>, transform_indices = @transform_3, window_bounds = array<i64: 8, 64>}, {pipeline_mode = #tpu.pipeline_mode<synchronous>, transform_indices = @transform_4, window_bounds = array<i64: 8, 1>}, {transform_indices = @transform_5, window_bounds = array<i64: 8, 256>}]} {
    %c0 = arith.constant 0 : index
    %c0_0 = arith.constant 0 : index
    %0 = vector.load %arg1[%c0, %c0_0] : memref<256x32xf32, #tpu.memory_space<vmem>>, vector<256x32xf32>
    %1 = arith.truncf %0 : vector<256x32xf32> to vector<256x32xbf16>
    %c0_1 = arith.constant 0 : index
    %c0_2 = arith.constant 0 : index
    %2 = vector.load %arg2[%c0_1, %c0_2] : memref<64x32xbf16, #tpu.memory_space<vmem>>, vector<64x32xbf16>
    %cst = arith.constant dense<0.000000e+00> : vector<64x256xf32>
    %3 = tpu.matmul %2, %1, %cst {dimension_numbers = #tpu.dot_dimension_numbers<[1], [1], [0], [0], [0, 0, 1, 0], [], []>} : vector<64x32xbf16>, vector<256x32xbf16>, vector<64x256xf32> -> vector<64x256xf32>
    %c0_3 = arith.constant 0 : index
    %c0_4 = arith.constant 0 : index
    %4 = vector.load %arg3[%c0_3, %c0_4] : memref<64x1xf32, #tpu.memory_space<vmem>>, vector<64x1xf32>
    %5 = vector.broadcast %4 : vector<64x1xf32> to vector<64x256xf32>
    %6 = arith.addf %3, %5 : vector<64x256xf32>
    %7 = math.tanh %6 : vector<64x256xf32>
    %c0_5 = arith.constant 0 : index
    %c0_6 = arith.constant 0 : index
    %8 = vector.load %arg4[%c0_5, %c0_6] : memref<8x64xbf16, #tpu.memory_space<vmem>>, vector<8x64xbf16>
    %9 = arith.truncf %7 : vector<64x256xf32> to vector<64x256xbf16>
    %cst_7 = arith.constant dense<0.000000e+00> : vector<8x256xf32>
    %10 = tpu.matmul %8, %9, %cst_7 {dimension_numbers = #tpu.dot_dimension_numbers<[1], [0], [0], [1], [0, 0, 1, 1], [], []>} : vector<8x64xbf16>, vector<64x256xbf16>, vector<8x256xf32> -> vector<8x256xf32>
    %c0_8 = arith.constant 0 : index
    %c0_9 = arith.constant 0 : index
    %11 = vector.load %arg5[%c0_8, %c0_9] : memref<8x1xf32, #tpu.memory_space<vmem>>, vector<8x1xf32>
    %12 = vector.broadcast %11 : vector<8x1xf32> to vector<8x256xf32>
    %13 = arith.addf %10, %12 : vector<8x256xf32>
    %cst_10 = arith.constant dense<0xFF800000> : vector<256xf32>
    %14 = vector.multi_reduction <maximumf>, %13, %cst_10 [0] : vector<8x256xf32> to vector<256xf32>
    %15 = vector.shape_cast %14 : vector<256xf32> to vector<1x256xf32>
    %16 = vector.broadcast %15 : vector<1x256xf32> to vector<8x256xf32>
    %17 = arith.subf %13, %16 : vector<8x256xf32>
    %18 = math.exp %17 : vector<8x256xf32>
    %cst_11 = arith.constant dense<0.000000e+00> : vector<256xf32>
    %19 = vector.multi_reduction <add>, %18, %cst_11 [0] : vector<8x256xf32> to vector<256xf32>
    %20 = vector.shape_cast %19 : vector<256xf32> to vector<1x256xf32>
    %21 = tpu.reciprocal %20 : vector<1x256xf32> -> vector<1x256xf32>
    %22 = vector.broadcast %21 : vector<1x256xf32> to vector<8x256xf32>
    %23 = arith.mulf %18, %22 : vector<8x256xf32>
    %c0_12 = arith.constant 0 : index
    %c0_13 = arith.constant 0 : index
    %24 = vector.load %arg6[%c0_12, %c0_13] : memref<8x256xf32, #tpu.memory_space<vmem>>, vector<8x256xf32>
    tpu.vector_store %arg6[%c0_12, %c0_13], %23 {strides = array<i32>} : memref<8x256xf32, #tpu.memory_space<vmem>>, vector<8x256xf32>,
    return
  }
  func.func @transform_0(%arg0: i32) -> (i32, i32) {
    %c0_i32 = arith.constant 0 : i32
    %c0_i32_0 = arith.constant 0 : i32
    return %arg0, %c0_i32 : i32, i32
  }
  func.func @transform_1(%arg0: i32) -> (i32, i32) {
    %c0_i32 = arith.constant 0 : i32
    %c0_i32_0 = arith.constant 0 : i32
    %c0_i32_1 = arith.constant 0 : i32
    return %c0_i32, %c0_i32_0 : i32, i32
  }
  func.func @transform_2(%arg0: i32) -> (i32, i32) {
    %c0_i32 = arith.constant 0 : i32
    %c0_i32_0 = arith.constant 0 : i32
    %c0_i32_1 = arith.constant 0 : i32
    return %c0_i32, %c0_i32_0 : i32, i32
  }
  func.func @transform_3(%arg0: i32) -> (i32, i32) {
    %c0_i32 = arith.constant 0 : i32
    %c0_i32_0 = arith.constant 0 : i32
    %c0_i32_1 = arith.constant 0 : i32
    return %c0_i32, %c0_i32_0 : i32, i32
  }
  func.func @transform_4(%arg0: i32) -> (i32, i32) {
    %c0_i32 = arith.constant 0 : i32
    %c0_i32_0 = arith.constant 0 : i32
    %c0_i32_1 = arith.constant 0 : i32
    return %c0_i32, %c0_i32_0 : i32, i32
  }
  func.func @transform_5(%arg0: i32) -> (i32, i32) {
    %c0_i32 = arith.constant 0 : i32
    %c0_i32_0 = arith.constant 0 : i32
    return %c0_i32, %arg0 : i32, i32
  }
}

</mosaic_0001>

<llo_original>
// kernel: tpu_custom_call.1
$region0: #{tpu_custom_call.1}
  #allocation0 [shape = 'u32[]', space=smem, size = 0x4, offset = 0x4, fixed_abs, tag = 'smem constant byte address 0x4 - core index']
  #allocation1 [shape = 'u32[144,128]{1,0:T(1,128)}', space=vmem, size = 0x12000, scoped, tag = 'internal scratch']
  %s0 = inlined_call_operand.vmem [shape: f32[300,32], index: 0, kind: input, shape index: {}]
  %s1 = inlined_call_operand.vmem [shape: bf16[64,32], index: 1, kind: input, shape index: {}]
  %s2 = inlined_call_operand.vmem [shape: f32[64,1], index: 2, kind: input, shape index: {}]
  %s3 = inlined_call_operand.vmem [shape: bf16[8,64], index: 3, kind: input, shape index: {}]
  %s4 = inlined_call_operand.vmem [shape: f32[8,1], index: 4, kind: input, shape index: {}]
  %s5 = inlined_call_operand.hbm [shape: f32[8,512], index: 5, kind: output, shape index: {}]
  %s6 = sld [smem:[#allocation0]]
  $region53: #{tpu_custom_call.1} parent=0
    _
  %s8 = ssub.s32 1, %s6
  %s9 = scalar_select 0, %s8, %s6
  $region1: #{tpu_custom_call.1} parent=0
    #allocation2 [shape = 'u8[16384]{0}', space=vmem, size = 0x4000, scoped, tag = 'output window, operand 0']
    #allocation3 [shape = 's32[2]{0}', space=sflag, size = 0x8, scoped, tag = 'scoped memory for tpu_custom_call.1']
    %10 = vsyncpa [#allocation3], 0
    %s11 = scalar_lea.sflag [#allocation3], 1
    %12 = vsyncpa %s11, 0
    loop: start=0, step=1, limit=4
    $region2: #{tpu_custom_call.1} parent=1 // loop_pre_header
      _
    $region3: #{tpu_custom_call.1} parent=1 // loop_header
      %s14 = sphi 0, %s18
      %p15 = scmp.ge.s32.totalorder %s14, 4
      %s24 = sphi 0, %s26
      %s27 = sphi 0, %s24
      %s28 = sphi 0, %s27
      %s44 = sphi 0, %s28
      %s48 = sphi 0, %s48
      %s50 = sphi 0, %s48
      %s51 = sphi 0, %s50
      %s65 = sphi 0, %s51
      %s69 = sphi 0, %s69
      %s71 = sphi 0, %s69
      %s72 = sphi 0, %s71
      %s86 = sphi 0, %s72
      %s90 = sphi 0, %s90
      %s92 = sphi 0, %s90
      %s93 = sphi 0, %s92
      %s107 = sphi 0, %s93
      %s111 = sphi 0, %s111
      %s113 = sphi 0, %s111
      %s114 = sphi 0, %s113
      %s128 = sphi 0, %s114
      %s134 = sphi 0, %s136
      %s137 = sphi 0, %s134
      %s138 = sphi 0, %s137
      %s154 = sphi 0, %s138
    $region4: #{tpu_custom_call.1} parent=1 // loop_header_branch
      %17 = sbr.rel (%p15) target = $region8
    $region5: #{tpu_custom_call.1} parent=1 // loop_body
      %s19 = ssub.s32 %s14, 1
      %s20 = ssub.s32 %s14, 2
      %s21 = sadd.s32 %s14, 1
      %s22 = ssub.s32 %s14, %s21
      %p23 = scmp.eq.s32.totalorder %s22, 0
      %s25 = sadd.s32 %s24, 1
      %s26 = scalar_select %p23, %s24, %s25
      %p29 = pneg %p23
      %p30 = scmp.eq.s32.totalorder %s14, 1
      %p31 = por %p29, %p30
      %p32 = scmp.ne.s32.totalorder %s24, %s27
      %p33 = scmp.eq.s32.totalorder %s14, 0
      %p34 = por %p32, %p33
      %p35 = scmp.ne.s32.totalorder %s24, %s27
      %p36 = scmp.eq.s32.totalorder %s19, 1
      %p37 = por %p35, %p36
      %p38 = scmp.ne.s32.totalorder %s27, %s28
      %p39 = scmp.eq.s32.totalorder %s19, 0
      %p40 = por %p38, %p39
      %p41 = scmp.ne.s32.totalorder %s27, %s28
      %p42 = scmp.eq.s32.totalorder %s20, 1
      %p43 = por %p41, %p42
      %p45 = scmp.ne.s32.totalorder %s28, %s44
      %p46 = scmp.eq.s32.totalorder %s20, 0
      %p47 = por %p45, %p46
      %s49 = sadd.s32 %s48, 1
      %p52 = scmp.eq.s32.totalorder %s14, 1
      %p53 = scmp.ne.s32.totalorder %s48, %s50
      %p54 = scmp.eq.s32.totalorder %s14, 0
      %p55 = por %p53, %p54
      %p56 = scmp.ne.s32.totalorder %s48, %s50
      %p57 = scmp.eq.s32.totalorder %s19, 1
      %p58 = por %p56, %p57
      %p59 = scmp.ne.s32.totalorder %s50, %s51
      %p60 = scmp.eq.s32.totalorder %s19, 0
      %p61 = por %p59, %p60
      %p62 = scmp.ne.s32.totalorder %s50, %s51
      %p63 = scmp.eq.s32.totalorder %s20, 1
      %p64 = por %p62, %p63
      %p66 = scmp.ne.s32.totalorder %s51, %s65
      %p67 = scmp.eq.s32.totalorder %s20, 0
      %p68 = por %p66, %p67
      %s70 = sadd.s32 %s69, 1
      %p73 = scmp.eq.s32.totalorder %s14, 1
      %p74 = scmp.ne.s32.totalorder %s69, %s71
      %p75 = scmp.eq.s32.totalorder %s14, 0
      %p76 = por %p74, %p75
      %p77 = scmp.ne.s32.totalorder %s69, %s71
      %p78 = scmp.eq.s32.totalorder %s19, 1
      %p79 = por %p77, %p78
      %p80 = scmp.ne.s32.totalorder %s71, %s72
      %p81 = scmp.eq.s32.totalorder %s19, 0
      %p82 = por %p80, %p81
      %p83 = scmp.ne.s32.totalorder %s71, %s72
      %p84 = scmp.eq.s32.totalorder %s20, 1
      %p85 = por %p83, %p84
      %p87 = scmp.ne.s32.totalorder %s72, %s86
      %p88 = scmp.eq.s32.totalorder %s20, 0
      %p89 = por %p87, %p88
      %s91 = sadd.s32 %s90, 1
      %p94 = scmp.eq.s32.totalorder %s14, 1
      %p95 = scmp.ne.s32.totalorder %s90, %s92
      %p96 = scmp.eq.s32.totalorder %s14, 0
      %p97 = por %p95, %p96
      %p98 = scmp.ne.s32.totalorder %s90, %s92
      %p99 = scmp.eq.s32.totalorder %s19, 1
      %p100 = por %p98, %p99
      %p101 = scmp.ne.s32.totalorder %s92, %s93
      %p102 = scmp.eq.s32.totalorder %s19, 0
      %p103 = por %p101, %p102
      %p104 = scmp.ne.s32.totalorder %s92, %s93
      %p105 = scmp.eq.s32.totalorder %s20, 1
      %p106 = por %p104, %p105
      %p108 = scmp.ne.s32.totalorder %s93, %s107
      %p109 = scmp.eq.s32.totalorder %s20, 0
      %p110 = por %p108, %p109
      %s112 = sadd.s32 %s111, 1
      %p115 = scmp.eq.s32.totalorder %s14, 1
      %p116 = scmp.ne.s32.totalorder %s111, %s113
      %p117 = scmp.eq.s32.totalorder %s14, 0
      %p118 = por %p116, %p117
      %p119 = scmp.ne.s32.totalorder %s111, %s113
      %p120 = scmp.eq.s32.totalorder %s19, 1
      %p121 = por %p119, %p120
      %p122 = scmp.ne.s32.totalorder %s113, %s114
      %p123 = scmp.eq.s32.totalorder %s19, 0
      %p124 = por %p122, %p123
      %p125 = scmp.ne.s32.totalorder %s113, %s114
      %p126 = scmp.eq.s32.totalorder %s20, 1
      %p127 = por %p125, %p126
      %p129 = scmp.ne.s32.totalorder %s114, %s128
      %p130 = scmp.eq.s32.totalorder %s20, 0
      %p131 = por %p129, %p130
      %s132 = ssub.s32 %s14, %s21
      %p133 = scmp.eq.s32.totalorder %s132, 0
      %s135 = sadd.s32 %s134, 1
      %s136 = scalar_select %p133, %s134, %s135
      %p139 = pneg %p133
      %p140 = scmp.eq.s32.totalorder %s14, 1
      %p141 = por %p139, %p140
      %p142 = scmp.ne.s32.totalorder %s134, %s137
      %p143 = scmp.eq.s32.totalorder %s14, 0
      %p144 = por %p142, %p143
      %p145 = scmp.ne.s32.totalorder %s134, %s137
      %p146 = scmp.eq.s32.totalorder %s19, 1
      %p147 = por %p145, %p146
      %p148 = scmp.ne.s32.totalorder %s137, %s138
      %p149 = scmp.eq.s32.totalorder %s19, 0
      %p150 = por %p148, %p149
      %p151 = scmp.ne.s32.totalorder %s137, %s138
      %p152 = scmp.eq.s32.totalorder %s20, 1
      %p153 = por %p151, %p152
      %p155 = scmp.ne.s32.totalorder %s138, %s154
      %p156 = scmp.eq.s32.totalorder %s20, 0
      %p157 = por %p155, %p156
      %p158 = scmp.le.s32.totalorder 1, %s14
      %p159 = scmp.lt.s32.totalorder %s14, 3
      %p160 = pnand %p158, %p159
      %p161 = pneg %p160
      // Predicated region
      $region9: #{tpu_custom_call.1} parent=5 // pred_check
        _
      $region10: #{tpu_custom_call.1} parent=5 // pred_check_branch
        %163 = sbr.rel (%p160) target = $region12
      $region11: #{tpu_custom_call.1} parent=5 // pred_region
        %s164 = ssub.s32 %s14, 1
        // Predicated region
        $region13: #{tpu_custom_call.1} parent=11 // pred_check
          %p165 = pneg %p61
        $region14: #{tpu_custom_call.1} parent=11 // pred_check_branch
          %167 = sbr.rel (%p165) target = $region16
        $region15: #{tpu_custom_call.1} parent=11 // pred_region
          _
        $region16: #{tpu_custom_call.1} parent=11 // pred_fallthru
          _
        // Predicated region
        $region17: #{tpu_custom_call.1} parent=11 // pred_check
          %p168 = pneg %p82
        $region18: #{tpu_custom_call.1} parent=11 // pred_check_branch
          %170 = sbr.rel (%p168) target = $region20
        $region19: #{tpu_custom_call.1} parent=11 // pred_region
          _
        $region20: #{tpu_custom_call.1} parent=11 // pred_fallthru
          _
        // Predicated region
        $region21: #{tpu_custom_call.1} parent=11 // pred_check
          %p171 = pneg %p103
        $region22: #{tpu_custom_call.1} parent=11 // pred_check_branch
          %173 = sbr.rel (%p171) target = $region24
        $region23: #{tpu_custom_call.1} parent=11 // pred_region
          _
        $region24: #{tpu_custom_call.1} parent=11 // pred_fallthru
          _
        // Predicated region
        $region25: #{tpu_custom_call.1} parent=11 // pred_check
          %p174 = pneg %p124
        $region26: #{tpu_custom_call.1} parent=11 // pred_check_branch
          %176 = sbr.rel (%p174) target = $region28
        $region27: #{tpu_custom_call.1} parent=11 // pred_region
          _
        $region28: #{tpu_custom_call.1} parent=11 // pred_fallthru
          _
      $region12: #{tpu_custom_call.1} parent=5 // pred_fallthru
        _
      %p177 = scmp.lt.s32.totalorder %s14, 2
      // Predicated region
      $region29: #{tpu_custom_call.1} parent=5 // pred_check
        %p178 = pneg %p177
      $region30: #{tpu_custom_call.1} parent=5 // pred_check_branch
        %180 = sbr.rel (%p178) target = $region32
      $region31: #{tpu_custom_call.1} parent=5 // pred_region
        // Predicated region
        $region33: #{tpu_custom_call.1} parent=31 // pred_check
          %p181 = pneg %p34
        $region34: #{tpu_custom_call.1} parent=31 // pred_check_branch
          %183 = sbr.rel (%p181) target = $region36
        $region35: #{tpu_custom_call.1} parent=31 // pred_region
          %s184 = smul.u32 32, %s14
          %s185 = ssub.s32 38, %s184
          %p186 = scmp.lt.s32.totalorder %s185, 32
          %s187 = scalar_select %p186, %s185, 32
          %s188 = smul.u32 128, %s187
          %p189 = scmp.lt.s32.totalorder %s184, 37
          %s190 = scalar_select %p189, %s184, 37
          %s191 = smul.addr %s190, 8
          %s192 = scalar_lea.vmem %s0, %s191
          %s193 = smul.u32 32, %s14
          %s194 = ssub.s32 38, %s193
          %p195 = scmp.lt.s32.totalorder %s194, 32
          %s196 = scalar_select %p195, %s194, 32
          %s197 = smul.u32 128, %s196
        $region36: #{tpu_custom_call.1} parent=31 // pred_fallthru
          _
      $region32: #{tpu_custom_call.1} parent=5 // pred_fallthru
        _
      %p198 = scmp.le.s32.totalorder 1, %s14
      %p199 = scmp.lt.s32.totalorder %s14, 3
      %p200 = pnand %p198, %p199
      %p201 = pneg %p200
      // Predicated region
      $region37: #{tpu_custom_call.1} parent=5 // pred_check
        _
      $region38: #{tpu_custom_call.1} parent=5 // pred_check_branch
        %203 = sbr.rel (%p200) target = $region40
      $region39: #{tpu_custom_call.1} parent=5 // pred_region
        %s204 = ssub.s32 %s14, 1
        %s205 = smul.u32 32, %s19
        %s206 = ssub.s32 38, %s205
        %p207 = scmp.lt.s32.totalorder %s206, 32
        %s208 = scalar_select %p207, %s206, 32
        %s209 = smul.u32 128, %s208
        %p210 = scmp.lt.s32.totalorder %s205, 37
        %s211 = scalar_select %p210, %s205, 37
        %s212 = smul.addr %s211, 8
        %s213 = scalar_lea.vmem %s0, %s212
        %p214 = pneg %p40
        %p215 = pneg %p37
        %p216 = pneg %p61
        %p217 = pneg %p58
        %p218 = pneg %p82
        %p219 = pneg %p79
        %p220 = pneg %p103
        %p221 = pneg %p100
        %p222 = pneg %p124
        %p223 = pneg %p121
        %p224 = pneg %p150
        %p225 = pneg %p147
        %s226 = sand.u32 %s137, 1
        %s227 = scalar_lea.sflag [#allocation3], %s226
        %s228 = sand.u32 %s137, 1
        %s229 = smul.addr %s228, 16
        %s230 = scalar_lea.vmem [#allocation2], %s229
        %s231 = smul.u32 32, %s19
        %s232 = ssub.s32 38, %s231
        %p233 = scmp.lt.s32.totalorder %s232, 32
        %s234 = scalar_select %p233, %s232, 32
        %s235 = smul.u32 128, %s234
        %p236 = scmp.lt.s32.totalorder %s231, 37
        %s237 = scalar_select %p236, %s231, 37
        %s238 = smul.addr %s237, 8
        %s239 = scalar_lea.vmem %s0, %s238
        %s240 = smul.u32 32, %s19
        %s241 = ssub.s32 38, %s240
        %p242 = scmp.lt.s32.totalorder %s241, 32
        %s243 = scalar_select %p242, %s241, 32
        %s244 = smul.u32 128, %s243
        %s245 = smul.u32 2, %s19
        %v247 = vld [vmem:[%s239] sm:$0xff]
        %v248 = vld [vmem:[%s239 + $0x8] sm:$0xff]
        %v249 = vld [vmem:[%s239 + $0x10] sm:$0xff]
        %v250 = vld [vmem:[%s239 + $0x18] sm:$0xff]
        %v251 = vld [vmem:[%s239 + $0x20] sm:$0xff]
        %v252 = vld [vmem:[%s239 + $0x28] sm:$0xff]
        %v253 = vld [vmem:[%s239 + $0x30] sm:$0xff]
        %v254 = vld [vmem:[%s239 + $0x38] sm:$0xff]
        %v255 = vld [vmem:[%s239 + $0x40] sm:$0xff]
        %v256 = vld [vmem:[%s239 + $0x48] sm:$0xff]
        %v257 = vld [vmem:[%s239 + $0x50] sm:$0xff]
        %v258 = vld [vmem:[%s239 + $0x58] sm:$0xff]
        %v259 = vld [vmem:[%s239 + $0x60] sm:$0xff]
        %v260 = vld [vmem:[%s239 + $0x68] sm:$0xff]
        %v261 = vld [vmem:[%s239 + $0x70] sm:$0xff]
        %v262 = vld [vmem:[%s239 + $0x78] sm:$0xff]
        %v263 = vld [vmem:[%s239 + $0x80] sm:$0xff]
        %v264 = vld [vmem:[%s239 + $0x88] sm:$0xff]
        %v265 = vld [vmem:[%s239 + $0x90] sm:$0xff]
        %v266 = vld [vmem:[%s239 + $0x98] sm:$0xff]
        %v267 = vld [vmem:[%s239 + $0xa0] sm:$0xff]
        %v268 = vld [vmem:[%s239 + $0xa8] sm:$0xff]
        %v269 = vld [vmem:[%s239 + $0xb0] sm:$0xff]
        %v270 = vld [vmem:[%s239 + $0xb8] sm:$0xff]
        %v271 = vld [vmem:[%s239 + $0xc0] sm:$0xff]
        %v272 = vld [vmem:[%s239 + $0xc8] sm:$0xff]
        %v273 = vld [vmem:[%s239 + $0xd0] sm:$0xff]
        %v274 = vld [vmem:[%s239 + $0xd8] sm:$0xff]
        %v275 = vld [vmem:[%s239 + $0xe0] sm:$0xff]
        %v276 = vld [vmem:[%s239 + $0xe8] sm:$0xff]
        %v277 = vld [vmem:[%s239 + $0xf0] sm:$0xff]
        %v278 = vld [vmem:[%s239 + $0xf8] sm:$0xff]
        %v279 = vpack.c.bf16 %v248, %v247
        %v280 = vpack.c.bf16 %v250, %v249
        %v281 = vpack.c.bf16 %v252, %v251
        %v282 = vpack.c.bf16 %v254, %v253
        %v283 = vpack.c.bf16 %v256, %v255
        %v284 = vpack.c.bf16 %v258, %v257
        %v285 = vpack.c.bf16 %v260, %v259
        %v286 = vpack.c.bf16 %v262, %v261
        %v287 = vpack.c.bf16 %v264, %v263
        %v288 = vpack.c.bf16 %v266, %v265
        %v289 = vpack.c.bf16 %v268, %v267
        %v290 = vpack.c.bf16 %v270, %v269
        %v291 = vpack.c.bf16 %v272, %v271
        %v292 = vpack.c.bf16 %v274, %v273
        %v293 = vpack.c.bf16 %v276, %v275
        %v294 = vpack.c.bf16 %v278, %v277
        %v295 = vld [vmem:[%s1] sm:$0xf]
        %v296 = vld [vmem:[%s1 + $0x4] sm:$0xf]
        %v297 = vld [vmem:[%s1 + $0x8] sm:$0xf]
        %v298 = vld [vmem:[%s1 + $0xc] sm:$0xf]
        %v299 = vld [vmem:[%s1 + $0x10] sm:$0xf]
        %v300 = vld [vmem:[%s1 + $0x14] sm:$0xf]
        %v301 = vld [vmem:[%s1 + $0x18] sm:$0xf]
        %v302 = vld [vmem:[%s1 + $0x1c] sm:$0xf]
        %v303 = vld [vmem:[%s2] sm:$0xff]
        %v304 = vld [vmem:[%s2 + $0x8] sm:$0xff]
        %v305 = vld [vmem:[%s2 + $0x10] sm:$0xff]
        %v306 = vld [vmem:[%s2 + $0x18] sm:$0xff]
        %v307 = vld [vmem:[%s2 + $0x20] sm:$0xff]
        %v308 = vld [vmem:[%s2 + $0x28] sm:$0xff]
        %v309 = vld [vmem:[%s2 + $0x30] sm:$0xff]
        %v310 = vld [vmem:[%s2 + $0x38] sm:$0xff]
        %312 = vset.pattern.permute.xlu0 0
        %313 = vperm.xlu0 %312, %v303
        %v314 = vpop.permute.xlu0 %313
        %317 = vset.pattern.permute.xlu0 0
        %318 = vperm.xlu0 %317, %v304
        %v319 = vpop.permute.xlu0 %318
        %322 = vset.pattern.permute.xlu0 0
        %323 = vperm.xlu0 %322, %v305
        %v324 = vpop.permute.xlu0 %323
        %327 = vset.pattern.permute.xlu0 0
        %328 = vperm.xlu0 %327, %v306
        %v329 = vpop.permute.xlu0 %328
        %332 = vset.pattern.permute.xlu0 0
        %333 = vperm.xlu0 %332, %v307
        %v334 = vpop.permute.xlu0 %333
        %337 = vset.pattern.permute.xlu0 0
        %338 = vperm.xlu0 %337, %v308
        %v339 = vpop.permute.xlu0 %338
        %342 = vset.pattern.permute.xlu0 0
        %343 = vperm.xlu0 %342, %v309
        %v344 = vpop.permute.xlu0 %343
        %347 = vset.pattern.permute.xlu0 0
        %348 = vperm.xlu0 %347, %v310
        %v349 = vpop.permute.xlu0 %348
        %v359 = vunpack.c.l.b16 %v295
        %v360 = vunpack.c.l.b16 %v296
        %v361 = vunpack.c.l.b16 %v297
        %v362 = vunpack.c.l.b16 %v298
        %v363 = vunpack.c.l.b16 %v299
        %v364 = vunpack.c.l.b16 %v300
        %v365 = vunpack.c.l.b16 %v301
        %v366 = vunpack.c.l.b16 %v302
        %v367 = vpack.c.b16 %v360, %v359
        %v368 = vpack.c.b16 %v362, %v361
        %v369 = vpack.c.b16 %v364, %v363
        %v370 = vpack.c.b16 %v366, %v365
        %vm371 = vcmask 261120
        %v373 = vsel %vm371, %v367, 0
        %v376 = vsel %vm371, %v368, 0
        %v379 = vsel %vm371, %v369, 0
        %v382 = vsel %vm371, %v370, 0
        %v385 = vsel %vm371, %v279, 0
        %v388 = vsel %vm371, %v280, 0
        %v391 = vsel %vm371, %v281, 0
        %v394 = vsel %vm371, %v282, 0
        %v397 = vsel %vm371, %v283, 0
        %v400 = vsel %vm371, %v284, 0
        %v403 = vsel %vm371, %v285, 0
        %v406 = vsel %vm371, %v286, 0
        %v409 = vsel %vm371, %v287, 0
        %v412 = vsel %vm371, %v288, 0
        %v415 = vsel %vm371, %v289, 0
        %v418 = vsel %vm371, %v290, 0
        %v421 = vsel %vm371, %v291, 0
        %v424 = vsel %vm371, %v292, 0
        %v427 = vsel %vm371, %v293, 0
        %v430 = vsel %vm371, %v294, 0
        %432 = vmatprep.subr.bf16.mxu0 0
        %433 = vmatpush1.bf16.xpose.msra.mxu0 %v385
        %434 = vmatprep.subr.bf16.mxu0 0
        %435 = vmatpush1.bf16.xpose.msra.mxu0 %v388
        %436 = vmatprep.subr.bf16.mxu0 0
        %437 = vmatpush1.bf16.xpose.msra.mxu0 %v391
        %438 = vmatprep.subr.bf16.mxu0 0
        %439 = vmatpush1.bf16.xpose.msra.mxu0 %v394
        %440 = vmatprep.subr.bf16.mxu0 0
        %441 = vmatpush1.bf16.xpose.msra.mxu0 %v397
        %442 = vmatprep.subr.bf16.mxu0 0
        %443 = vmatpush1.bf16.xpose.msra.mxu0 %v400
        %444 = vmatprep.subr.bf16.mxu0 0
        %445 = vmatpush1.bf16.xpose.msra.mxu0 %v403
        %446 = vmatprep.subr.bf16.mxu0 0
        %447 = vmatpush1.bf16.xpose.msra.mxu0 %v406
        %448 = vmatprep.subr.bf16.mxu0 0
        %449 = vmatpush1.bf16.xpose.msra.mxu0 %v409
        %450 = vmatprep.subr.bf16.mxu0 0
        %451 = vmatpush1.bf16.xpose.msra.mxu0 %v412
        %452 = vmatprep.subr.bf16.mxu0 0
        %453 = vmatpush1.bf16.xpose.msra.mxu0 %v415
        %454 = vmatprep.subr.bf16.mxu0 0
        %455 = vmatpush1.bf16.xpose.msra.mxu0 %v418
        %456 = vmatprep.subr.bf16.mxu0 0
        %457 = vmatpush1.bf16.xpose.msra.mxu0 %v421
        %458 = vmatprep.subr.bf16.mxu0 0
        %459 = vmatpush1.bf16.xpose.msra.mxu0 %v424
        %460 = vmatprep.subr.bf16.mxu0 0
        %461 = vmatpush1.bf16.xpose.msra.mxu0 %v427
        %462 = vmatprep.subr.bf16.mxu0 0
        %463 = vmatpush1.bf16.xpose.msra.mxu0 %v430
        %464 = vmatprep.mubr.bf16.mxu0 0
        %465 = vmatmul.mubr.bf16.gmra.mrb[0].mxu0 %v373
        %v466 = vpop.f32.mrb[0].mxu0
        %v467 = vadd.f32 %v314, %v466
        %v468 = vpop.f32.mrb[0].mxu0
        %v469 = vadd.f32 %v314, %v468
        %v470 = vpop.f32.mrb[0].mxu0
        %v471 = vadd.f32 %v319, %v470
        %v472 = vpop.f32.mrb[0].mxu0
        %v473 = vadd.f32 %v319, %v472
        %474 = vmatprep.mubr.bf16.mxu0 0
        %475 = vmatmul.mubr.bf16.gmra.mrb[0].mxu0 %v376
        %v476 = vpop.f32.mrb[0].mxu0
        %v477 = vadd.f32 %v324, %v476
        %v478 = vpop.f32.mrb[0].mxu0
        %v479 = vadd.f32 %v324, %v478
        %v480 = vpop.f32.mrb[0].mxu0
        %v481 = vadd.f32 %v329, %v480
        %v482 = vpop.f32.mrb[0].mxu0
        %v483 = vadd.f32 %v329, %v482
        %484 = vmatprep.mubr.bf16.mxu0 0
        %485 = vmatmul.mubr.bf16.gmra.mrb[0].mxu0 %v379
        %v486 = vpop.f32.mrb[0].mxu0
        %v487 = vadd.f32 %v334, %v486
        %v488 = vpop.f32.mrb[0].mxu0
        %v489 = vadd.f32 %v334, %v488
        %v490 = vpop.f32.mrb[0].mxu0
        %v491 = vadd.f32 %v339, %v490
        %v492 = vpop.f32.mrb[0].mxu0
        %v493 = vadd.f32 %v339, %v492
        %494 = vmatprep.mubr.bf16.mxu0 0
        %495 = vmatmul.mubr.bf16.gmra.mrb[0].mxu0 %v382
        %v496 = vpop.f32.mrb[0].mxu0
        %v497 = vadd.f32 %v344, %v496
        %v498 = vpop.f32.mrb[0].mxu0
        %v499 = vadd.f32 %v344, %v498
        %v500 = vpop.f32.mrb[0].mxu0
        %v501 = vadd.f32 %v349, %v500
        %v502 = vpop.f32.mrb[0].mxu0
        %v503 = vadd.f32 %v349, %v502
        %504 = vdwg.mxu0
        %v505 = vtanh.pop %v467
        %v506 = vtanh.pop %v469
        %v507 = vtanh.pop %v471
        %v508 = vtanh.pop %v473
        %v509 = vtanh.pop %v477
        %v510 = vtanh.pop %v479
        %v511 = vtanh.pop %v481
        %v512 = vtanh.pop %v483
        %v513 = vtanh.pop %v487
        %v514 = vtanh.pop %v489
        %v515 = vtanh.pop %v491
        %v516 = vtanh.pop %v493
        %v517 = vtanh.pop %v497
        %v518 = vtanh.pop %v499
        %v519 = vtanh.pop %v501
        %v520 = vtanh.pop %v503
        %v521 = vld [vmem:[%s3] sm:$0xf]
        %v522 = vpack.c.bf16 %v507, %v505
        %v523 = vpack.c.bf16 %v508, %v506
        %v524 = vpack.c.bf16 %v511, %v509
        %v525 = vpack.c.bf16 %v512, %v510
        %v526 = vpack.c.bf16 %v515, %v513
        %v527 = vpack.c.bf16 %v516, %v514
        %v528 = vpack.c.bf16 %v519, %v517
        %v529 = vpack.c.bf16 %v520, %v518
        %v530 = vld [vmem:[%s4] sm:$0xff]
        %532 = vset.pattern.permute.xlu0 0
        %533 = vperm.xlu0 %532, %v530
        %v534 = vpop.permute.xlu0 %533
        %vm536 = vcmask 523264
        %v538 = vsel %vm536, %v521, 0
        %540 = vmatprep.subr.bf16.mxu0 %v523
        %541 = vmatpush1.bf16.msra.mxu0 %v522
        %542 = vmatprep.subr.bf16.mxu0 %v525
        %543 = vmatpush1.bf16.msra.mxu0 %v524
        %544 = vmatprep.subr.bf16.mxu0 %v527
        %545 = vmatpush1.bf16.msra.mxu0 %v526
        %546 = vmatprep.subr.bf16.mxu0 %v529
        %547 = vmatpush1.bf16.msra.mxu0 %v528
        %548 = vmatprep.subr.bf16.mxu0 0
        %549 = vmatpush1.bf16.msra.mxu0 0
        %550 = vmatprep.subr.bf16.mxu0 0
        %551 = vmatpush1.bf16.msra.mxu0 0
        %552 = vmatprep.subr.bf16.mxu0 0
        %553 = vmatpush1.bf16.msra.mxu0 0
        %554 = vmatprep.subr.bf16.mxu0 0
        %555 = vmatpush1.bf16.msra.mxu0 0
        %556 = vmatprep.subr.bf16.mxu0 0
        %557 = vmatpush1.bf16.msra.mxu0 0
        %558 = vmatprep.subr.bf16.mxu0 0
        %559 = vmatpush1.bf16.msra.mxu0 0
        %560 = vmatprep.subr.bf16.mxu0 0
        %561 = vmatpush1.bf16.msra.mxu0 0
        %562 = vmatprep.subr.bf16.mxu0 0
        %563 = vmatpush1.bf16.msra.mxu0 0
        %564 = vmatprep.subr.bf16.mxu0 0
        %565 = vmatpush1.bf16.msra.mxu0 0
        %566 = vmatprep.subr.bf16.mxu0 0
        %567 = vmatpush1.bf16.msra.mxu0 0
        %568 = vmatprep.subr.bf16.mxu0 0
        %569 = vmatpush1.bf16.msra.mxu0 0
        %570 = vmatprep.subr.bf16.mxu0 0
        %571 = vmatpush1.bf16.msra.mxu0 0
        %572 = vmatprep.mubr.bf16.mxu0 0
        %573 = vmatmul.mubr.bf16.gmra.mrb[0].mxu0 %v538
        %v574 = vpop.f32.mrb[0].mxu0
        %v575 = vadd.f32 %v534, %v574
        %v576 = vpop.f32.mrb[0].mxu0
        %v577 = vadd.f32 %v534, %v576
        %v578 = vpop.f32.mrb[0].mxu0
        %v579 = vpop.f32.mrb[0].mxu0
        %580 = vdwg.mxu0
        %v581 = vrot.slane %v575, 4
        %v582 = vmax.f32 %v575, %v581
        %v583 = vrot.slane %v582, 2
        %v584 = vmax.f32 %v582, %v583
        %v585 = vrot.slane %v584, 1
        %v586 = vmax.f32 %v584, %v585
        %v587 = vrot.slane %v577, 4
        %v588 = vmax.f32 %v577, %v587
        %v589 = vrot.slane %v588, 2
        %v590 = vmax.f32 %v588, %v589
        %v591 = vrot.slane %v590, 1
        %v592 = vmax.f32 %v590, %v591
        %v593 = vsub.f32 %v575, %v586
        %v594 = vsub.f32 %v577, %v592
        %v595 = vmul.f32 %v593, 1.442695
        %v596 = vpow.pop %v595
        %v597 = vmul.f32 %v594, 1.442695
        %v598 = vpow.pop %v597
        %v599 = vrot.slane %v596, 4
        %v600 = vadd.f32 %v596, %v599
        %v601 = vrot.slane %v600, 2
        %v602 = vadd.f32 %v600, %v601
        %v603 = vrot.slane %v602, 1
        %v604 = vadd.f32 %v602, %v603
        %v605 = vrot.slane %v598, 4
        %v606 = vadd.f32 %v598, %v605
        %v607 = vrot.slane %v606, 2
        %v608 = vadd.f32 %v606, %v607
        %v609 = vrot.slane %v608, 1
        %v610 = vadd.f32 %v608, %v609
        %v611 = vrcp.pop %v604
        %v612 = vrcp.pop %v610
        %v613 = vmul.f32 %v596, %v611
        %v614 = vmul.f32 %v598, %v612
        %615 = vst [vmem:[%s230] sm:$0xff] %v613
        %616 = vst [vmem:[%s230 + $0x8] sm:$0xff] %v614
        %s617 = sand.u32 %s137, 1
        %s618 = scalar_lea.sflag [#allocation3], %s617
        %s619 = sand.u32 %s137, 1
        %s620 = smul.addr %s619, 16
        %s621 = scalar_lea.vmem [#allocation2], %s620
        // Predicated region
        $region41: #{tpu_custom_call.1} parent=39 // pred_check
          %p622 = pneg %p147
        $region42: #{tpu_custom_call.1} parent=39 // pred_check_branch
          %624 = sbr.rel (%p622) target = $region44
        $region43: #{tpu_custom_call.1} parent=39 // pred_region
          %s625 = smul.u32 2, %s19
          %s627 = ssub.s32 256, 256
          %628 = vsyncadd %s618, %s627
          %s629 = smul.addr %s625, 128
          %s630 = scalar_lea.hbm %s5, %s629
          %s632 = sshll.u32 %s621, 4
          %s633 = int_to_ptr.vmem [resolvable:$true] %s632
          %635 = dma.vmem_to_hbm [thread:$0]  %s633, 256, %s630, %s618
        $region44: #{tpu_custom_call.1} parent=39 // pred_fallthru
          _
      $region40: #{tpu_custom_call.1} parent=5 // pred_fallthru
        _
      %p636 = scmp.le.s32.totalorder 2, %s14
      // Predicated region
      $region45: #{tpu_custom_call.1} parent=5 // pred_check
        %p637 = pneg %p636
      $region46: #{tpu_custom_call.1} parent=5 // pred_check_branch
        %639 = sbr.rel (%p637) target = $region48
      $region47: #{tpu_custom_call.1} parent=5 // pred_region
        %s640 = ssub.s32 %s14, 2
        // Predicated region
        $region49: #{tpu_custom_call.1} parent=47 // pred_check
          %p641 = pneg %p153
        $region50: #{tpu_custom_call.1} parent=47 // pred_check_branch
          %643 = sbr.rel (%p641) target = $region52
        $region51: #{tpu_custom_call.1} parent=47 // pred_region
          %s644 = sand.u32 %s138, 1
          %s645 = scalar_lea.sflag [#allocation3], %s644
          %s646 = sand.u32 %s138, 1
          %s647 = smul.addr %s646, 16
          %s648 = scalar_lea.vmem [#allocation2], %s647
          %649 = dma.done %s645, 256
        $region52: #{tpu_custom_call.1} parent=47 // pred_fallthru
          _
      $region48: #{tpu_custom_call.1} parent=5 // pred_fallthru
        _
    $region6: #{tpu_custom_call.1} parent=1 // loop_footer
      %s18 = sadd.s32 1, %s14
    $region7: #{tpu_custom_call.1} parent=1 // loop_footer_branch
      %13 = sbr.rel target = $region3
    $region8: #{tpu_custom_call.1} parent=1 // loop_exit
      _
    %650 = vsyncpa [#allocation3], 1
    %s651 = scalar_lea.sflag [#allocation3], 1
    %652 = vsyncpa %s651, 1

</llo_original>
